<compile_context>
chip_gen: v7x
topology: tpu7x:2x2x1
jax: 0.10.0
libtpu: 0.0.40
codegen_flags: <defaults>
</compile_context>

<pallas_src>
import functools

import jax
import jax.numpy as jnp
from jax import lax
from jax.experimental import pallas as pl
from jax.experimental.pallas import tpu as pltpu

GAMMA = 2.0          # FocalLoss(gamma=2.0, alpha=0.25, size_average=True)
ALPHA = 0.25
LANE = 128
SUBLANE = 8
# Padded VMEM footprint of one (single-buffered) grid step.  x2 for double
# buffering + slack keeps the scoped limit well under v7x's 64 MiB physical.
STEP_VMEM_BUDGET = 16 * 1024 * 1024


def _round_up(x, m):
    return (x + m - 1) // m * m


def _sublane_tile(dtype):
    itemsize = jnp.dtype(dtype).itemsize
    return max(SUBLANE, 32 // max(itemsize, 1))   # f32:8, bf16:16, int8/bool:32


def _padded_plane_bytes(r, l, dtype):
    """VMEM bytes of one (r, l) plane after (sublane, lane) tiling."""
    itemsize = jnp.dtype(dtype).itemsize
    return _round_up(r, _sublane_tile(dtype)) * _round_up(l, LANE) * itemsize


def _detect_num_cores(default=2):
    """Best-effort TensorCore count (2 on v7x; 1 on v5e/v6e if detectable)."""
    try:
        info = pltpu.get_tpu_info()
        for name in ("num_tensorcores", "tensorcore_count", "num_cores",
                     "cores_per_chip", "num_cores_per_chip"):
            val = getattr(info, name, None)
            if val:
                return max(1, min(2, int(val)))
    except Exception:
        pass
    return default   # a size-2 serial outer loop is harmless on single-TC chips


def _focal_loss_kernel(x_ref, t_ref, out_ref, *, gamma, alpha0, alpha1,
                       n_total, block_n, tiles_per_core, ragged_start,
                       have_ragged):
    # x_ref:   (block_n, 2, R, L) logits (any float dtype, cast in-register)
    # t_ref:   (block_n, R, L)    integer class ids in {0, 1}
    # out_ref: (1, 1, 1) f32      per-core partial sum (resident along k)
    c = pl.program_id(0)
    k = pl.program_id(1)
    tile = c * tiles_per_core + k          # global tile index (small; no overflow)

    @pl.when(k == 0)
    def _():
        out_ref[...] = jnp.zeros_like(out_ref)

    x0 = x_ref[:, 0, :, :].astype(jnp.float32)   # class-0 logits
    x1 = x_ref[:, 1, :, :].astype(jnp.float32)   # class-1 logits
    is0 = t_ref[...].astype(jnp.int32) == 0

    # z = logit(target class) - logit(other class).  Two-class log-softmax and
    # softmax from a single exp + log1p (+ one reciprocal):
    #   logpt = -softplus(-z) = min(z, 0) - log1p(exp(-|z|))
    #   pt    = sigmoid(z);  1 - pt is formed directly (no cancellation).
    d = x0 - x1
    z = jnp.where(is0, d, -d)
    e = jnp.exp(-jnp.abs(z))                     # EUP op 1
    s = jnp.log1p(e)                             # EUP op 2
    logpt = jnp.minimum(z, 0.0) - s
    # Exact reciprocal keeps ~1e-7 agreement with the reference; approx=True is
    # a v7x micro-opt if ~1e-4 relative error in pt is acceptable.
    inv = pl.reciprocal(1.0 + e, approx=False)
    omp = jnp.where(z >= 0.0, e * inv, inv)      # omp = 1 - pt, always >= 0

    at = jnp.where(is0, jnp.float32(alpha0), jnp.float32(alpha1))
    wlogpt = logpt * at

    if gamma == 2.0:
        focal = omp * omp                        # avoid pow -> exp/log round trip
    elif gamma == 1.0:
        focal = omp
    elif gamma == 0.0:
        focal = jnp.ones_like(omp)
    else:
        focal = jnp.power(omp, jnp.float32(gamma))
    loss = -focal * wlogpt                       # (block_n, R, L)

    if not have_ragged:
        # Every tile is exactly full: no mask anywhere on the hot path.
        out_ref[...] += jnp.sum(loss)
    else:
        @pl.when(tile < ragged_start)
        def _():                                 # full tiles: no mask cost
            out_ref[...] += jnp.sum(loss)

        @pl.when(tile >= ragged_start)
        def _():                                 # partial / phantom tiles only
            n_idx = tile * block_n + lax.broadcasted_iota(
                jnp.int32, loss.shape, 0)
            out_ref[...] += jnp.sum(jnp.where(n_idx < n_total, loss, 0.0))


def focal_loss(inputs, target, *, gamma=GAMMA, alpha=ALPHA, size_average=True):
    """inputs: (N, 2, H, W) float logits (NCHW); target: (N, H, W) ints in {0,1}."""
    N, C, H, W = inputs.shape
    assert C == 2, "alpha gather in the reference implies binary classification"
    assert target.shape == (N, H, W)
    HW = H * W
    M = N * HW

    # Free, row-major reshapes only (contiguous NCHW): no slicing, no padding,
    # no dtype conversion before the kernel.
    if HW % LANE == 0:
        R, L = HW // LANE, LANE          # lane-dense (R, 128) per-class planes
    else:
        R, L = 1, HW                     # still zero-copy/correct; layout pads sublanes
    x = inputs.reshape(N, 2, R, L)
    t = target.reshape(N, R, L)

    # --- Tile sizing: whole samples per grid step, rebalanced so at most one
    # ragged tile exists, sized against a fixed padded-VMEM budget. ---
    per_sample = (2 * _padded_plane_bytes(R, L, x.dtype)
                  + _padded_plane_bytes(R, L, t.dtype))
    block_n0 = max(1, min(N, STEP_VMEM_BUDGET // per_sample))
    # TODO(synk): add an HW-split grid axis for single samples larger than the
    # per-step VMEM budget (currently one sample must fit in a block).

    num_cores_req = _detect_num_cores()
    # Prefer >= 2 tiles per core (pipelining / both TCs on v7x) when N allows.
    n_tiles = max(pl.cdiv(N, block_n0), min(N, 2 * num_cores_req))
    block_n = pl.cdiv(N, n_tiles)        # rebalance: spread samples evenly
    n_tiles = pl.cdiv(N, block_n)

    cores = max(1, min(num_cores_req, n_tiles))
    tiles_per_core = pl.cdiv(n_tiles, cores)
    padded_tiles = cores * tiles_per_core
    # Tiles >= ragged_start need the tail mask (a partial last tile and/or the
    # phantom tiles created by rounding n_tiles up to cores * tiles_per_core).
    ragged_start = n_tiles if N % block_n == 0 else n_tiles - 1
    have_ragged = ragged_start < padded_tiles

    last_tile = n_tiles - 1

    def tile_map(c, k):
        # Clamp so phantom tiles just re-read the last real block (their
        # contribution is masked to zero in-kernel); every DMA stays in bounds.
        return jnp.minimum(c * tiles_per_core + k, last_tile)

    x_map = lambda c, k: (tile_map(c, k), 0, 0, 0)
    t_map = lambda c, k: (tile_map(c, k), 0, 0)

    kernel = functools.partial(
        _focal_loss_kernel,
        gamma=float(gamma), alpha0=float(alpha), alpha1=float(1.0 - alpha),
        n_total=N, block_n=block_n, tiles_per_core=tiles_per_core,
        ragged_start=ragged_start, have_ragged=have_ragged)

    vmem_limit = int(min(max(2 * block_n * per_sample + (8 << 20), 32 << 20),
                         96 << 20))

    partials = pl.pallas_call(
        kernel,
        out_shape=jax.ShapeDtypeStruct((cores, 1, 1), jnp.float32),
        grid_spec=pltpu.PrefetchScalarGridSpec(
            num_scalar_prefetch=0,
            grid=(cores, tiles_per_core),
            in_specs=[
                pl.BlockSpec((block_n, 2, R, L), x_map),   # last 2 dims = full extents
                pl.BlockSpec((block_n, R, L), t_map),
            ],
            out_specs=pl.BlockSpec((1, 1, 1), lambda c, k: (c, 0, 0)),
        ),
        compiler_params=pltpu.CompilerParams(
            dimension_semantics=("parallel", "arbitrary"),
            vmem_limit_bytes=vmem_limit),
    )(x, t)

    total = jnp.sum(partials)            # tiny epilogue reduce (<= 2 scalars)
    return total / M if size_average else total


def _focal_loss_ref(inputs, target, *, gamma=GAMMA, alpha=ALPHA):
    N, C, H, W = inputs.shape
    flat = jnp.transpose(inputs.reshape(N, C, H * W), (0, 2, 1)).reshape(-1, C)
    t = target.reshape(-1).astype(jnp.int32)
    logp = jax.nn.log_softmax(flat.astype(jnp.float32), axis=1)
    logpt = jnp.take_along_axis(logp, t[:, None], axis=1)[:, 0]
    pt = jnp.exp(logpt)
    alpha_vec = jnp.array([alpha, 1.0 - alpha], jnp.float32)
    logpt = logpt * alpha_vec[t]
    loss = -((1.0 - pt) ** gamma) * logpt
    return loss.mean()


if __name__ == "__main__":
    key = jax.random.PRNGKey(0)
    k1, k2 = jax.random.split(key)
    N, C, H, W = 2, 2, 16, 16                       # NCHW, binary classes
    inputs = jax.random.normal(k1, (N, C, H, W), jnp.float32)
    # int8 targets: the kernel consumes them as-is (9 B/elem instead of 12).
    target = jax.random.bernoulli(k2, 0.5, (N, H, W)).astype(jnp.int8)

    out = jax.block_until_ready(focal_loss(inputs, target))
    ref = _focal_loss_ref(inputs, target)
    assert jnp.allclose(out, ref, rtol=1e-5, atol=1e-5), (out, ref)
    print("KERNEL_OK")
</pallas_src>

<mosaic_0001>
module attributes {stable_mosaic.version = 11 : i64} {
  func.func @_focal_loss_kernel(%arg0: i32, %arg1: i32, %arg2: memref<1x2x2x128xf32, #tpu.memory_space<vmem>>, %arg3: memref<1x2x128xi8, #tpu.memory_space<vmem>>, %arg4: memref<1x1x1xf32, #tpu.memory_space<vmem>>) attributes {dimension_semantics = [#tpu.dimension_semantics<parallel>, #tpu.dimension_semantics<arbitrary>], iteration_bounds = array<i64: 2, 1>, scalar_prefetch = 0 : i64, scratch_operands = 0 : i64, tpu.core_type = #tpu.core_type<tc>, window_params = [{transform_indices = @transform_0, window_bounds = array<i64: 1, 2, 2, 128>}, {transform_indices = @transform_1, window_bounds = array<i64: 1, 2, 128>}, {transform_indices = @transform_2, window_bounds = array<i64: 1, 1, 1>}]} {
    %c0_i32 = arith.constant 0 : i32
    %0 = arith.cmpi eq, %arg1, %c0_i32 : i32
    %1 = arith.extui %0 : i1 to i32
    %c0_i32_0 = arith.constant 0 : i32
    %2 = arith.cmpi ne, %1, %c0_i32_0 : i32
    scf.if %2 {
      %cst_25 = arith.constant 0.000000e+00 : f32
      %46 = vector.broadcast %cst_25 : f32 to vector<1x1x1xf32>
      %c0_26 = arith.constant 0 : index
      %c0_27 = arith.constant 0 : index
      %c0_28 = arith.constant 0 : index
      %47 = vector.load %arg4[%c0_26, %c0_27, %c0_28] : memref<1x1x1xf32, #tpu.memory_space<vmem>>, vector<1x1x1xf32>
      tpu.vector_store %arg4[%c0_26, %c0_27, %c0_28], %46 {strides = array<i32>} : memref<1x1x1xf32, #tpu.memory_space<vmem>>, vector<1x1x1xf32>,
    } else {
    }
    %c0 = arith.constant 0 : index
    %c0_1 = arith.constant 0 : index
    %c0_2 = arith.constant 0 : index
    %c0_3 = arith.constant 0 : index
    %3 = vector.load %arg2[%c0, %c0_1, %c0_2, %c0_3] : memref<1x2x2x128xf32, #tpu.memory_space<vmem>>, vector<1x1x2x128xf32>
    %4 = vector.shape_cast %3 : vector<1x1x2x128xf32> to vector<1x2x128xf32>
    %c0_4 = arith.constant 0 : index
    %c1 = arith.constant 1 : index
    %c0_5 = arith.constant 0 : index
    %c0_6 = arith.constant 0 : index
    %5 = vector.load %arg2[%c0_4, %c1, %c0_5, %c0_6] : memref<1x2x2x128xf32, #tpu.memory_space<vmem>>, vector<1x1x2x128xf32>
    %6 = vector.shape_cast %5 : vector<1x1x2x128xf32> to vector<1x2x128xf32>
    %c0_7 = arith.constant 0 : index
    %c0_8 = arith.constant 0 : index
    %c0_9 = arith.constant 0 : index
    %7 = vector.load %arg3[%c0_7, %c0_8, %c0_9] : memref<1x2x128xi8, #tpu.memory_space<vmem>>, vector<1x2x128xi8>
    %8 = arith.extsi %7 : vector<1x2x128xi8> to vector<1x2x128xi32>
    %c0_i32_10 = arith.constant 0 : i32
    %9 = vector.broadcast %c0_i32_10 : i32 to vector<1x2x128xi32>
    %10 = arith.cmpi eq, %8, %9 : vector<1x2x128xi32>
    %11 = arith.subf %4, %6 : vector<1x2x128xf32>
    %cst = arith.constant 0.000000e+00 : f32
    %12 = vector.broadcast %cst : f32 to vector<1x2x128xf32>
    %13 = arith.subf %12, %11 : vector<1x2x128xf32>
    %14 = arith.select %10, %11, %13 : vector<1x2x128xi1>, vector<1x2x128xf32>
    %15 = math.absf %14 : vector<1x2x128xf32>
    %cst_11 = arith.constant 0.000000e+00 : f32
    %16 = vector.broadcast %cst_11 : f32 to vector<1x2x128xf32>
    %17 = arith.subf %16, %15 : vector<1x2x128xf32>
    %18 = math.exp %17 : vector<1x2x128xf32>
    %19 = math.log1p %18 : vector<1x2x128xf32>
    %cst_12 = arith.constant 0.000000e+00 : f32
    %20 = vector.broadcast %cst_12 : f32 to vector<1x2x128xf32>
    %21 = arith.minimumf %14, %20 : vector<1x2x128xf32>
    %22 = arith.subf %21, %19 : vector<1x2x128xf32>
    %cst_13 = arith.constant 1.000000e+00 : f32
    %23 = vector.broadcast %cst_13 : f32 to vector<1x2x128xf32>
    %24 = arith.addf %23, %18 : vector<1x2x128xf32>
    %25 = tpu.reciprocal %24 : vector<1x2x128xf32> -> vector<1x2x128xf32>
    %cst_14 = arith.constant 0.000000e+00 : f32
    %26 = vector.broadcast %cst_14 : f32 to vector<1x2x128xf32>
    %27 = arith.cmpf oge, %14, %26 : vector<1x2x128xf32>
    %28 = arith.mulf %18, %25 : vector<1x2x128xf32>
    %29 = arith.select %27, %28, %25 : vector<1x2x128xi1>, vector<1x2x128xf32>
    %cst_15 = arith.constant 2.500000e-01 : f32
    %cst_16 = arith.constant 7.500000e-01 : f32
    %30 = vector.broadcast %cst_15 : f32 to vector<1x2x128xf32>
    %31 = vector.broadcast %cst_16 : f32 to vector<1x2x128xf32>
    %32 = arith.select %10, %30, %31 : vector<1x2x128xi1>, vector<1x2x128xf32>
    %33 = arith.mulf %22, %32 : vector<1x2x128xf32>
    %34 = arith.mulf %29, %29 : vector<1x2x128xf32>
    %cst_17 = arith.constant 0.000000e+00 : f32
    %35 = vector.broadcast %cst_17 : f32 to vector<1x2x128xf32>
    %36 = arith.subf %35, %34 : vector<1x2x128xf32>
    %37 = arith.mulf %36, %33 : vector<1x2x128xf32>
    %c0_18 = arith.constant 0 : index
    %c0_19 = arith.constant 0 : index
    %c0_20 = arith.constant 0 : index
    %38 = vector.load %arg4[%c0_18, %c0_19, %c0_20] : memref<1x1x1xf32, #tpu.memory_space<vmem>>, vector<1x1x1xf32>
    %39 = vector.shape_cast %37 : vector<1x2x128xf32> to vector<1x1x2x128xf32>
    %cst_21 = arith.constant dense<0.000000e+00> : vector<1xf32>
    %40 = vector.multi_reduction <add>, %39, %cst_21 [1, 2, 3] : vector<1x1x2x128xf32> to vector<1xf32>
    %41 = vector.shape_cast %40 : vector<1xf32> to vector<1x1x1x1xf32>
    %42 = vector.extract %41[0, 0, 0, 0] : f32 from vector<1x1x1x1xf32>
    %43 = vector.broadcast %42 : f32 to vector<1x1x1xf32>
    %44 = arith.addf %38, %43 : vector<1x1x1xf32>
    %c0_22 = arith.constant 0 : index
    %c0_23 = arith.constant 0 : index
    %c0_24 = arith.constant 0 : index
    %45 = vector.load %arg4[%c0_22, %c0_23, %c0_24] : memref<1x1x1xf32, #tpu.memory_space<vmem>>, vector<1x1x1xf32>
    tpu.vector_store %arg4[%c0_22, %c0_23, %c0_24], %44 {strides = array<i32>} : memref<1x1x1xf32, #tpu.memory_space<vmem>>, vector<1x1x1xf32>,
    return
  }
  func.func @transform_0(%arg0: i32, %arg1: i32) -> (i32, i32, i32, i32) {
    %c1_i32 = arith.constant 1 : i32
    %0 = arith.muli %arg0, %c1_i32 : i32
    %1 = arith.addi %0, %arg1 : i32
    %c1_i32_0 = arith.constant 1 : i32
    %2 = arith.minsi %1, %c1_i32_0 : i32
    %c0_i32 = arith.constant 0 : i32
    %c0_i32_1 = arith.constant 0 : i32
    %c0_i32_2 = arith.constant 0 : i32
    %c0_i32_3 = arith.constant 0 : i32
    return %2, %c0_i32, %c0_i32_1, %c0_i32_2 : i32, i32, i32, i32
  }
  func.func @transform_1(%arg0: i32, %arg1: i32) -> (i32, i32, i32) {
    %c1_i32 = arith.constant 1 : i32
    %0 = arith.muli %arg0, %c1_i32 : i32
    %1 = arith.addi %0, %arg1 : i32
    %c1_i32_0 = arith.constant 1 : i32
    %2 = arith.minsi %1, %c1_i32_0 : i32
    %c0_i32 = arith.constant 0 : i32
    %c0_i32_1 = arith.constant 0 : i32
    %c0_i32_2 = arith.constant 0 : i32
    return %2, %c0_i32, %c0_i32_1 : i32, i32, i32
  }
  func.func @transform_2(%arg0: i32, %arg1: i32) -> (i32, i32, i32) {
    %c0_i32 = arith.constant 0 : i32
    %c0_i32_0 = arith.constant 0 : i32
    %c0_i32_1 = arith.constant 0 : i32
    return %arg0, %c0_i32, %c0_i32_0 : i32, i32, i32
  }
}

</mosaic_0001>

<llo_original>
// kernel: tpu_custom_call.1
$region0: #{tpu_custom_call.1}
  #allocation0 [shape = 'u32[]', space=smem, size = 0x4, offset = 0x4, fixed_abs, tag = 'smem constant byte address 0x4 - core index']
  #allocation1 [shape = 'u32[144,128]{1,0:T(1,128)}', space=vmem, size = 0x12000, scoped, tag = 'internal scratch']
  %s0 = inlined_call_operand.hbm [shape: f32[2,2,2,128], index: 0, kind: input, shape index: {}]
  %s1 = inlined_call_operand.vmem [shape: s8[2,2,128], index: 1, kind: input, shape index: {}]
  %s2 = inlined_call_operand.vmem [shape: f32[2,1,1], index: 2, kind: output, shape index: {}]
  %s3 = sld [smem:[#allocation0]]
  $region49: #{tpu_custom_call.1} parent=0
    _
  %s5 = ssub.s32 1, %s3
  %s6 = scalar_select 0, %s5, %s3
  $region1: #{tpu_custom_call.1} parent=0
    #allocation2 [shape = 'u8[4096]{0}', space=vmem, size = 0x1000, scoped, tag = 'input window, operand 0']
    #allocation3 [shape = 's32[2]{0}', space=sflag, size = 0x8, scoped, tag = 'scoped memory for tpu_custom_call.1']
    %7 = vsyncpa [#allocation3], 0
    %s8 = scalar_lea.sflag [#allocation3], 1
    %9 = vsyncpa %s8, 0
    loop: start=0, step=1, limit=4
    $region2: #{tpu_custom_call.1} parent=1 // loop_pre_header
      _
    $region3: #{tpu_custom_call.1} parent=1 // loop_header
      %s11 = sphi 0, %s15
      %p12 = scmp.ge.s32.totalorder %s11, 4
      %s18 = sphi 0, %s30
      %s19 = sphi 0, %s26
      %s20 = sphi 0, %s18
      %s21 = sphi 0, %s19
      %s22 = sphi 0, %s20
      %s23 = sphi 0, %s21
      %s39 = sphi 0, %s41
      %s42 = sphi 0, %s39
      %s43 = sphi 0, %s42
      %s59 = sphi 0, %s43
      %s71 = sphi 0, %s73
      %s74 = sphi 0, %s71
      %s75 = sphi 0, %s74
      %s91 = sphi 0, %s75
      %s97 = sphi 0, %s99
      %s100 = sphi 0, %s97
      %s101 = sphi 0, %s100
      %s117 = sphi 0, %s101
    $region4: #{tpu_custom_call.1} parent=1 // loop_header_branch
      %14 = sbr.rel (%p12) target = $region8
    $region5: #{tpu_custom_call.1} parent=1 // loop_body
      %s16 = ssub.s32 %s11, 1
      %s17 = ssub.s32 %s11, 2
      %s24 = sadd.s32 1, %s19
      %p25 = scmp.ge.s32.totalorder %s24, 1
      %s26 = scalar_select %p25, 0, %s24
      %s27 = sadd.s32 1, %s18
      %s28 = scalar_select %p25, %s27, %s18
      %p29 = scmp.ge.s32.totalorder %s28, 2
      %s30 = scalar_select %p29, 0, %s28
      %s31 = sadd.s32 %s18, %s19
      %p32 = scmp.lt.s32.totalorder %s31, 1
      %s33 = scalar_select %p32, %s31, 1
      %s34 = sadd.s32 %s30, %s26
      %p35 = scmp.lt.s32.totalorder %s34, 1
      %s36 = scalar_select %p35, %s34, 1
      %s37 = ssub.s32 %s33, %s36
      %p38 = scmp.eq.s32.totalorder %s37, 0
      %s40 = sadd.s32 %s39, 1
      %s41 = scalar_select %p38, %s39, %s40
      %p44 = pneg %p38
      %p45 = scmp.eq.s32.totalorder %s11, 1
      %p46 = por %p44, %p45
      %p47 = scmp.ne.s32.totalorder %s39, %s42
      %p48 = scmp.eq.s32.totalorder %s11, 0
      %p49 = por %p47, %p48
      %p50 = scmp.ne.s32.totalorder %s39, %s42
      %p51 = scmp.eq.s32.totalorder %s16, 1
      %p52 = por %p50, %p51
      %p53 = scmp.ne.s32.totalorder %s42, %s43
      %p54 = scmp.eq.s32.totalorder %s16, 0
      %p55 = por %p53, %p54
      %p56 = scmp.ne.s32.totalorder %s42, %s43
      %p57 = scmp.eq.s32.totalorder %s17, 1
      %p58 = por %p56, %p57
      %p60 = scmp.ne.s32.totalorder %s43, %s59
      %p61 = scmp.eq.s32.totalorder %s17, 0
      %p62 = por %p60, %p61
      %s63 = sadd.s32 %s18, %s19
      %p64 = scmp.lt.s32.totalorder %s63, 1
      %s65 = scalar_select %p64, %s63, 1
      %s66 = sadd.s32 %s30, %s26
      %p67 = scmp.lt.s32.totalorder %s66, 1
      %s68 = scalar_select %p67, %s66, 1
      %s69 = ssub.s32 %s65, %s68
      %p70 = scmp.eq.s32.totalorder %s69, 0
      %s72 = sadd.s32 %s71, 1
      %s73 = scalar_select %p70, %s71, %s72
      %p76 = pneg %p70
      %p77 = scmp.eq.s32.totalorder %s11, 1
      %p78 = por %p76, %p77
      %p79 = scmp.ne.s32.totalorder %s71, %s74
      %p80 = scmp.eq.s32.totalorder %s11, 0
      %p81 = por %p79, %p80
      %p82 = scmp.ne.s32.totalorder %s71, %s74
      %p83 = scmp.eq.s32.totalorder %s16, 1
      %p84 = por %p82, %p83
      %p85 = scmp.ne.s32.totalorder %s74, %s75
      %p86 = scmp.eq.s32.totalorder %s16, 0
      %p87 = por %p85, %p86
      %p88 = scmp.ne.s32.totalorder %s74, %s75
      %p89 = scmp.eq.s32.totalorder %s17, 1
      %p90 = por %p88, %p89
      %p92 = scmp.ne.s32.totalorder %s75, %s91
      %p93 = scmp.eq.s32.totalorder %s17, 0
      %p94 = por %p92, %p93
      %s95 = ssub.s32 %s18, %s30
      %p96 = scmp.eq.s32.totalorder %s95, 0
      %s98 = sadd.s32 %s97, 1
      %s99 = scalar_select %p96, %s97, %s98
      %p102 = pneg %p96
      %p103 = scmp.eq.s32.totalorder %s11, 1
      %p104 = por %p102, %p103
      %p105 = scmp.ne.s32.totalorder %s97, %s100
      %p106 = scmp.eq.s32.totalorder %s11, 0
      %p107 = por %p105, %p106
      %p108 = scmp.ne.s32.totalorder %s97, %s100
      %p109 = scmp.eq.s32.totalorder %s16, 1
      %p110 = por %p108, %p109
      %p111 = scmp.ne.s32.totalorder %s100, %s101
      %p112 = scmp.eq.s32.totalorder %s16, 0
      %p113 = por %p111, %p112
      %p114 = scmp.ne.s32.totalorder %s100, %s101
      %p115 = scmp.eq.s32.totalorder %s17, 1
      %p116 = por %p114, %p115
      %p118 = scmp.ne.s32.totalorder %s101, %s117
      %p119 = scmp.eq.s32.totalorder %s17, 0
      %p120 = por %p118, %p119
      %p121 = scmp.le.s32.totalorder 1, %s11
      %p122 = scmp.lt.s32.totalorder %s11, 3
      %p123 = pnand %p121, %p122
      %p124 = pneg %p123
      // Predicated region
      $region9: #{tpu_custom_call.1} parent=5 // pred_check
        _
      $region10: #{tpu_custom_call.1} parent=5 // pred_check_branch
        %126 = sbr.rel (%p123) target = $region12
      $region11: #{tpu_custom_call.1} parent=5 // pred_region
        %s127 = ssub.s32 %s11, 1
      $region12: #{tpu_custom_call.1} parent=5 // pred_fallthru
        _
      %p128 = scmp.lt.s32.totalorder %s11, 2
      // Predicated region
      $region13: #{tpu_custom_call.1} parent=5 // pred_check
        %p129 = pneg %p128
      $region14: #{tpu_custom_call.1} parent=5 // pred_check_branch
        %131 = sbr.rel (%p129) target = $region16
      $region15: #{tpu_custom_call.1} parent=5 // pred_region
        // Predicated region
        $region17: #{tpu_custom_call.1} parent=15 // pred_check
          %p132 = pneg %p49
        $region18: #{tpu_custom_call.1} parent=15 // pred_check_branch
          %134 = sbr.rel (%p132) target = $region20
        $region19: #{tpu_custom_call.1} parent=15 // pred_region
          %s135 = sand.u32 %s39, 1
          %s136 = scalar_lea.sflag [#allocation3], %s135
          %s137 = sand.u32 %s39, 1
          %s138 = smul.addr %s137, 4
          %s139 = scalar_lea.vmem [#allocation2], %s138
          %s140 = sadd.s32 %s18, %s19
          %p141 = scmp.lt.s32.totalorder %s140, 1
          %s142 = scalar_select %p141, %s140, 1
          %s144 = ssub.s32 64, 64
          %145 = vsyncadd %s136, %s144
          %s146 = smul.addr %s142, 2
          %s147 = smul.addr %s146, 32
          %s148 = scalar_lea.hbm %s0, %s147
          %s149 = sshll.u32 %s139, 4
          %s150 = int_to_ptr.vmem [resolvable:$true] %s149
          %155 = dma.hbm_to_vmem [thread:$0]  %s148, 64, %s150, %s136, 32, 32, 2
        $region20: #{tpu_custom_call.1} parent=15 // pred_fallthru
          _
        // Predicated region
        $region21: #{tpu_custom_call.1} parent=15 // pred_check
          %p156 = pneg %p81
        $region22: #{tpu_custom_call.1} parent=15 // pred_check_branch
          %158 = sbr.rel (%p156) target = $region24
        $region23: #{tpu_custom_call.1} parent=15 // pred_region
          %s159 = sadd.s32 %s18, %s19
          %p160 = scmp.lt.s32.totalorder %s159, 1
          %s161 = scalar_select %p160, %s159, 1
          %p162 = scmp.lt.s32.totalorder %s161, 1
          %s163 = scalar_select %p162, %s161, 1
          %s164 = scalar_lea.vmem %s1, %s163
          %s165 = sadd.s32 %s18, %s19
          %p166 = scmp.lt.s32.totalorder %s165, 1
          %s167 = scalar_select %p166, %s165, 1
        $region24: #{tpu_custom_call.1} parent=15 // pred_fallthru
          _
      $region16: #{tpu_custom_call.1} parent=5 // pred_fallthru
        _
      %p168 = scmp.le.s32.totalorder 1, %s11
      %p169 = scmp.lt.s32.totalorder %s11, 3
      %p170 = pnand %p168, %p169
      %p171 = pneg %p170
      // Predicated region
      $region25: #{tpu_custom_call.1} parent=5 // pred_check
        _
      $region26: #{tpu_custom_call.1} parent=5 // pred_check_branch
        %173 = sbr.rel (%p170) target = $region28
      $region27: #{tpu_custom_call.1} parent=5 // pred_region
        %s174 = ssub.s32 %s11, 1
        %s175 = sand.u32 %s42, 1
        %s176 = scalar_lea.sflag [#allocation3], %s175
        %s177 = sand.u32 %s42, 1
        %s178 = smul.addr %s177, 4
        %s179 = scalar_lea.vmem [#allocation2], %s178
        // Predicated region
        $region29: #{tpu_custom_call.1} parent=27 // pred_check
          %p180 = pneg %p55
        $region30: #{tpu_custom_call.1} parent=27 // pred_check_branch
          %182 = sbr.rel (%p180) target = $region32
        $region31: #{tpu_custom_call.1} parent=27 // pred_region
          %183 = dma.done %s176, 64
        $region32: #{tpu_custom_call.1} parent=27 // pred_fallthru
          _
        %s184 = sand.u32 %s42, 1
        %s185 = scalar_lea.sflag [#allocation3], %s184
        %s186 = sand.u32 %s42, 1
        %s187 = smul.addr %s186, 4
        %s188 = scalar_lea.vmem [#allocation2], %s187
        %p189 = pneg %p55
        %p190 = pneg %p52
        %s191 = sadd.s32 %s20, %s21
        %p192 = scmp.lt.s32.totalorder %s191, 1
        %s193 = scalar_select %p192, %s191, 1
        %p194 = scmp.lt.s32.totalorder %s193, 1
        %s195 = scalar_select %p194, %s193, 1
        %s196 = scalar_lea.vmem %s1, %s195
        %p197 = pneg %p87
        %p198 = pneg %p84
        %p199 = pneg %p113
        %p200 = pneg %p110
        %p201 = scmp.lt.s32.totalorder %s20, 1
        %s202 = scalar_select %p201, %s20, 1
        %s203 = scalar_lea.vmem %s2, %s202
        %s204 = sadd.s32 %s20, %s21
        %p205 = scmp.lt.s32.totalorder %s204, 1
        %s206 = scalar_select %p205, %s204, 1
        %s207 = sadd.s32 %s20, %s21
        %p208 = scmp.lt.s32.totalorder %s207, 1
        %s209 = scalar_select %p208, %s207, 1
        %p210 = scmp.lt.s32.totalorder %s209, 1
        %s211 = scalar_select %p210, %s209, 1
        %s212 = scalar_lea.vmem %s1, %s211
        %s213 = sadd.s32 %s20, %s21
        %p214 = scmp.lt.s32.totalorder %s213, 1
        %s215 = scalar_select %p214, %s213, 1
        %p216 = scmp.lt.s32.totalorder %s20, 1
        %s217 = scalar_select %p216, %s20, 1
        %s218 = scalar_lea.vmem %s2, %s217
        %p219 = scmp.eq.s32.totalorder %s21, 0
        // Predicated region
        $region33: #{tpu_custom_call.1} parent=27 // pred_check
          %p220 = pneg %p219
        $region34: #{tpu_custom_call.1} parent=27 // pred_check_branch
          %222 = sbr.rel (%p220) target = $region36
        $region35: #{tpu_custom_call.1} parent=27 // pred_region
          %vm223 = vcmask 0
          %224 = vst.msk [vmem:[%s218] sm:$0x1] %vm223, 0.0
        $region36: #{tpu_custom_call.1} parent=27 // pred_fallthru
          _
        %v225 = vld [vmem:[%s179] sm:$0x3]
        %s226 = scalar_lea.vmem %s179, 2 [#allocation2]
        %v227 = vld [vmem:[%s226] sm:$0x3]
        %v228 = vld [vmem:[%s212] sm:$0x1]
        %v229 = vunpack.c.0.s8 %v228
        %vm230 = vcmp.eq.s32.totalorder %v229, 0
        %v231 = vsub.f32 %v225, %v227
        %v232 = vsub.f32 0.0, %v231
        %v233 = vsel %vm230, %v231, %v232
        %v234 = vand.u32 2147483647, %v233
        %v235 = vsub.f32 0.0, %v234
        %v236 = vmul.f32 %v235, 1.442695
        %v237 = vpow.pop %v236
        %v238 = vadd.f32 %v237, 1.0
        %v239 = vlog2.pop %v238
        %v240 = vmul.f32 %v239, 0.6931472
        %v241 = vmul.f32 -0.5, %v237
        %v242 = vadd.f32 %v241, 1.0
        %v243 = vmul.f32 %v242, %v237
        %v244 = vand.u32 2147483647, %v237
        %vm245 = vcmp.lt.f32.partialorder %v244, 0.0004427343
        %v246 = vsel %vm245, %v243, %v240
        %v247 = vmin.f32 %v233, 0.0
        %v248 = vsub.f32 %v247, %v246
        %v249 = vadd.f32 %v237, 1.0
        %v250 = vrcp.pop %v249
        %vm251 = vcmp.ge.f32.partialorder %v233, 0.0
        %v252 = vmul.f32 %v237, %v250
        %v253 = vsel %vm251, %v252, %v250
        %v254 = vsel %vm230, 0.25, 0.75
        %v255 = vmul.f32 %v248, %v254
        %v256 = vmul.f32 %v253, %v253
        %v257 = vsub.f32 0.0, %v256
        %v258 = vmul.f32 %v257, %v255
        %v259 = vld [vmem:[%s218] sm:$0x1]
        %vm260 = vcmask 1041408
        %v261 = vsel %vm260, %v258, 0.0
        %262 = vadd.xlane.f32.xlu0 %v261
        %v263 = vpop.xlane.xlu0 %262
        %v264 = vrot.slane %v263, 4
        %v265 = vadd.f32 %v263, %v264
        %v266 = vrot.slane %v265, 2
        %v267 = vadd.f32 %v265, %v266
        %v268 = vrot.slane %v267, 1
        %v269 = vadd.f32 %v267, %v268
        %s270 = vtos %v269
        %v271 = vstv %s270
        %v272 = vadd.f32 %v259, %v271
        %vm273 = vcmask 0
        %274 = vst.msk [vmem:[%s218] sm:$0x1] %vm273, %v272
        %p275 = scmp.lt.s32.totalorder %s20, 1
        %s276 = scalar_select %p275, %s20, 1
        %s277 = scalar_lea.vmem %s2, %s276
        // Predicated region
        $region37: #{tpu_custom_call.1} parent=27 // pred_check
          %p278 = pneg %p110
        $region38: #{tpu_custom_call.1} parent=27 // pred_check_branch
          %280 = sbr.rel (%p278) target = $region40
        $region39: #{tpu_custom_call.1} parent=27 // pred_region
          _
        $region40: #{tpu_custom_call.1} parent=27 // pred_fallthru
          _
      $region28: #{tpu_custom_call.1} parent=5 // pred_fallthru
        _
      %p281 = scmp.le.s32.totalorder 2, %s11
      // Predicated region
      $region41: #{tpu_custom_call.1} parent=5 // pred_check
        %p282 = pneg %p281
      $region42: #{tpu_custom_call.1} parent=5 // pred_check_branch
        %284 = sbr.rel (%p282) target = $region44
      $region43: #{tpu_custom_call.1} parent=5 // pred_region
        %s285 = ssub.s32 %s11, 2
        // Predicated region
        $region45: #{tpu_custom_call.1} parent=43 // pred_check
          %p286 = pneg %p116
        $region46: #{tpu_custom_call.1} parent=43 // pred_check_branch
          %288 = sbr.rel (%p286) target = $region48
        $region47: #{tpu_custom_call.1} parent=43 // pred_region
          %p289 = scmp.lt.s32.totalorder %s22, 1
          %s290 = scalar_select %p289, %s22, 1
          %s291 = scalar_lea.vmem %s2, %s290
        $region48: #{tpu_custom_call.1} parent=43 // pred_fallthru
          _
      $region44: #{tpu_custom_call.1} parent=5 // pred_fallthru
        _
    $region6: #{tpu_custom_call.1} parent=1 // loop_footer
      %s15 = sadd.s32 1, %s11
    $region7: #{tpu_custom_call.1} parent=1 // loop_footer_branch
      %10 = sbr.rel target = $region3
    $region8: #{tpu_custom_call.1} parent=1 // loop_exit
      _
    %292 = vsyncpa [#allocation3], 1
    %s293 = scalar_lea.sflag [#allocation3], 1
    %294 = vsyncpa %s293, 1

</llo_original>
